<compile_context>
chip_gen: v7x
topology: tpu7x:2x2x1
jax: 0.10.0
libtpu: 0.0.40
codegen_flags: <defaults>
</compile_context>

<pallas_src>
import functools

import numpy as np
import jax
import jax.numpy as jnp
from jax import lax
from jax.experimental import pallas as pl
from jax.experimental.pallas import tpu as pltpu

# ----------------------------- fixed parameters -----------------------------
KSIZE = 15
SIGMA = 20.0
PAD = KSIZE // 2
CL_WEIGHT = 1.0            # stand-in for config.CL.weight
EPS = 3e-7
LANE = 128                 # TPU vreg lane width


def _gaussian_kernel1d(ksize, sigma):
    half = (ksize - 1) * 0.5
    x = np.linspace(-half, half, ksize)
    pdf = np.exp(-0.5 * (x / sigma) ** 2)
    return (pdf / pdf.sum()).astype(np.float32)


GAUSS_W = _gaussian_kernel1d(KSIZE, SIGMA)    # matches torchvision GaussianBlur


def _blur_band_matrix(n):
    """(n, n) band matrix M with reflect padding folded in:
       (M @ x)[i] = sum_k w[k] * x[reflect(i - PAD + k)]."""
    M = np.zeros((n, n), np.float32)
    for i in range(n):
        for k in range(KSIZE):
            j = i - PAD + k
            if j < 0:
                j = -j
            if j > n - 1:
                j = 2 * (n - 1) - j
            M[i, j] += GAUSS_W[k]
    return M


@functools.lru_cache(maxsize=None)
def _band_matrices(H, W, g):
    """Cached (Mv, block-diag Mw^T): no per-call host work / re-upload."""
    mv = _blur_band_matrix(H)                                    # (H, H)
    mw_t = _blur_band_matrix(W).T                                # (W, W)
    mwT_bd = np.kron(np.eye(g, dtype=np.float32), mw_t)          # (g*W, g*W)
    return np.ascontiguousarray(mv), np.ascontiguousarray(mwT_bd)


# --------------------------------- kernel -----------------------------------
def fcl_kernel(blur_ref, gt_ref, anc_ref, mwT_ref, mv_ref, out_ref):
    block, H, WL = blur_ref.shape          # WL = g*W (lane-dense folded width)

    blur = blur_ref[...].astype(jnp.float32)
    gt = gt_ref[...].astype(jnp.float32)
    anc = anc_ref[...].astype(jnp.float32)

    # ---- Gaussian re-blur on the MXU (bf16 operands, f32 accumulation) ------
    # Row pass: one (block*H, WL) @ (WL, WL) matmul against the block-diagonal
    # Mw^T (reflect padding folded in) -- fills the MXU M dimension instead of
    # per-plane dots, and avoids the multi-pass f32 HIGHEST lowering.
    if H % 8 == 0:
        x2 = blur.reshape(block * H, WL).astype(jnp.bfloat16)
        t = jnp.dot(x2, mwT_ref[...], preferred_element_type=jnp.float32)
        t = t.reshape(block, H, WL).astype(jnp.bfloat16)
    else:  # rare non-sublane-aligned H: batched form (no flat reshape)
        mwT_b = jnp.broadcast_to(mwT_ref[...], (block, WL, WL))
        t = jnp.einsum('rhc,rcd->rhd', blur.astype(jnp.bfloat16), mwT_b,
                       preferred_element_type=jnp.float32).astype(jnp.bfloat16)
    # Column pass: Mv broadcast over the tile -> one batched MXU matmul.
    mv_b = jnp.broadcast_to(mv_ref[...], (block, H, H))
    rebl = jnp.einsum('rhk,rkc->rhc', mv_b, t,
                      preferred_element_type=jnp.float32)

    # ---- Haar DWT (J=1) partial L1 sums --------------------------------------
    # W is even, so even-(row, col) positions never pair across folded planes
    # and the roll wrap-around only lands on masked (odd) positions.
    row = lax.broadcasted_iota(jnp.int32, (H, WL), 0)
    col = lax.broadcasted_iota(jnp.int32, (H, WL), 1)
    even_mask = jnp.logical_and(row % 2 == 0, col % 2 == 0).astype(jnp.float32)

    def dwt_sums(d, need_ll):
        d_w = pltpu.roll(d, shift=WL - 1, axis=2)      # d[..., j+1 (mod WL)]
        cs = d + d_w
        cd = d - d_w
        cs_h = pltpu.roll(cs, shift=H - 1, axis=1)     # row h+1 (mod H)
        cd_h = pltpu.roll(cd, shift=H - 1, axis=1)
        hi = jnp.abs(cs - cs_h) + jnp.abs(cd + cd_h) + jnp.abs(cd - cd_h)
        s_hi = 0.5 * jnp.sum(hi * even_mask)
        if not need_ll:
            return s_hi
        s_ll = 0.5 * jnp.sum(jnp.abs(cs + cs_h) * even_mask)
        return s_ll, s_hi

    s_pos_ll, s_pos_hi = dwt_sums(anc - gt, need_ll=True)     # anchor vs GT
    s_neg_blur_hi = dwt_sums(anc - blur, need_ll=False)       # anchor vs blur (hi)
    s_neg_rebl_hi = dwt_sums(anc - rebl, need_ll=False)       # anchor vs re-blur (hi)

    out_ref[0, 0] = s_pos_ll
    out_ref[0, 1] = s_pos_hi
    out_ref[0, 2] = s_neg_blur_hi
    out_ref[0, 3] = s_neg_rebl_hi


# ------------------------- VMEM / tiling planning ----------------------------
def _ceil_to(x, m):
    return -(-x // m) * m


def _plane_f32(h, wl):
    return _ceil_to(h, 8) * _ceil_to(wl, LANE) * 4


def _plane_bf16(h, wl):
    return _ceil_to(h, 16) * _ceil_to(wl, LANE) * 2


def _physical_vmem_bytes():
    try:
        info = pltpu.get_tpu_info()
        for attr in ("vmem_capacity_bytes", "vmem_size_bytes", "vmem_bytes"):
            v = getattr(info, attr, None)
            if v:
                return int(v)
    except Exception:
        pass
    return 64 * 1024 * 1024   # conservative fallback: v7x per-TC physical VMEM


def _vmem_plan(H, WL):
    """Per-generation scoped-VMEM limit + (8,128)-padded per-tile-row cost."""
    phys = _physical_vmem_bytes()
    limit = min(int(phys * 0.75), 100 * 1024 * 1024)   # explicit scoped limit
    budget = int(limit * 0.7)                          # working-set target
    # Per folded row: 3 double-buffered f32 inputs, bf16 matmul staging, f32
    # rebl, ~6 live f32 DWT temporaries (conservative), plus broadcast Mv slice.
    per_row = 14 * _plane_f32(H, WL) + _plane_bf16(H, H)
    # Double-buffered constant band matrices + pipeline bookkeeping slack.
    fixed = 2 * (_plane_bf16(WL, WL) + _plane_bf16(H, H)) + (2 << 20)
    return limit, budget, per_row, fixed


def _tiling(Rg, budget, per_row, fixed):
    usable = max(budget - fixed, per_row)
    block = max(1, min(Rg, usable // per_row))
    num_tiles = -(-Rg // block)
    if Rg >= 2:
        # >=2 tiles for DMA/compute overlap; even count so v7x's two TCs balance.
        num_tiles = max(num_tiles, 2)
        if num_tiles % 2:
            num_tiles += 1
    block = -(-Rg // num_tiles)
    return block, num_tiles


# -------------------------------- wrapper ------------------------------------
def fcl_loss(blur, GT, out, weight=CL_WEIGHT, input_dtype=jnp.float32):
    """Forward pass of FCL (the torch module's unused `network` arg is dropped).

    input_dtype=jnp.bfloat16 halves HBM traffic of the mem-bound DWT stage;
    default stays f32 so the loss matches the f32 reference to <5e-3.
    """
    B, CH, H, W = blur.shape
    assert H % 2 == 0 and W % 2 == 0, "Haar DWT (J=1) needs even H and W"
    assert PAD < H and PAD < W, "reflect padding needs PAD < spatial extent"
    # TODO(synk): planes are processed whole; very large H*W (>~2K^2) would need
    #             an additional spatial tiling pass.
    R = B * CH

    # Lane-dense folding: pack g planes along the lane axis when W < 128.
    g = min(max(1, LANE // W), R) if W < LANE else 1
    WL = g * W
    Rg = -(-R // g)

    limit, budget, per_row, fixed = _vmem_plan(H, WL)
    block, num_tiles = _tiling(Rg, budget, per_row, fixed)
    R_pad = num_tiles * block * g

    def fold(x):
        x = x.reshape(R, H, W).astype(input_dtype)
        if R_pad > R:   # zero planes contribute 0 to every partial sum
            x = jnp.concatenate([x, jnp.zeros((R_pad - R, H, W), x.dtype)], axis=0)
        return (x.reshape(R_pad // g, g, H, W)
                 .transpose(0, 2, 1, 3)
                 .reshape(R_pad // g, H, WL))

    b = fold(blur)
    p = fold(GT)
    a = fold(out)

    mv_np, mwT_np = _band_matrices(H, W, g)
    mv = jnp.asarray(mv_np, dtype=jnp.bfloat16)       # (H, H)
    mwT = jnp.asarray(mwT_np, dtype=jnp.bfloat16)     # (WL, WL), block-diagonal
    # TODO(synk): mv/mwT have constant index maps; pipeline_mode=pl.Buffered(1)
    #             would single-buffer them (their 2x footprint is in `fixed`).

    partials = pl.pallas_call(
        fcl_kernel,
        out_shape=jax.ShapeDtypeStruct((num_tiles, 4), jnp.float32),
        grid_spec=pltpu.PrefetchScalarGridSpec(
            num_scalar_prefetch=0,
            grid=(num_tiles,),
            in_specs=[
                pl.BlockSpec((block, H, WL), lambda i: (i, 0, 0)),   # blur
                pl.BlockSpec((block, H, WL), lambda i: (i, 0, 0)),   # GT
                pl.BlockSpec((block, H, WL), lambda i: (i, 0, 0)),   # anchor (out)
                pl.BlockSpec((WL, WL), lambda i: (0, 0)),            # Mw^T (block-diag)
                pl.BlockSpec((H, H), lambda i: (0, 0)),              # Mv
            ],
            out_specs=pl.BlockSpec((1, 4), lambda i: (i, 0),
                                   memory_space=pltpu.MemorySpace.SMEM),
        ),
        compiler_params=pltpu.CompilerParams(
            dimension_semantics=("parallel",),
            vmem_limit_bytes=limit),
    )(b, p, a, mwT, mv)

    # Tiny scalar combine in the wrapper (partial sums -> means -> ratio).
    sums = jnp.sum(partials, axis=0)
    n_ll = float(R * (H // 2) * (W // 2))
    n_hi = 3.0 * n_ll
    pos = sums[0] / n_ll + sums[1] / n_hi
    neg = 0.5 * (sums[2] + sums[3]) / n_hi
    return pos / (neg + EPS) * weight


# --------------------------- pure-JAX reference -------------------------------
def _ref_dwt(x):
    a = x[:, 0::2, 0::2]
    b = x[:, 0::2, 1::2]
    c = x[:, 1::2, 0::2]
    d = x[:, 1::2, 1::2]
    ll = 0.5 * (a + b + c + d)
    lh = 0.5 * (a + b - c - d)
    hl = 0.5 * (a - b + c - d)
    hh = 0.5 * (a - b - c + d)
    return ll, jnp.stack([lh, hl, hh], axis=1)


def ref_loss(blur, GT, out):
    B, CH, H, W = blur.shape
    r = B * CH
    b = blur.reshape(r, H, W).astype(jnp.float32)
    g = GT.reshape(r, H, W).astype(jnp.float32)
    a = out.reshape(r, H, W).astype(jnp.float32)
    w = jnp.asarray(GAUSS_W)
    cp = jnp.pad(b, ((0, 0), (PAD, PAD), (PAD, PAD)), mode="reflect")
    th = sum(w[k] * cp[:, :, k:k + W] for k in range(KSIZE))
    rebl = sum(w[k] * th[:, k:k + H, :] for k in range(KSIZE))

    a_ll, a_h = _ref_dwt(a)
    g_ll, g_h = _ref_dwt(g)
    pos = jnp.mean(jnp.abs(a_ll - g_ll)) + jnp.mean(jnp.abs(a_h - g_h))

    n_h = [_ref_dwt(n)[1] for n in (b, rebl)]
    neg = sum(jnp.mean(jnp.abs(a_h - nh)) for nh in n_h) / len(n_h)

    return pos / (neg + EPS) * CL_WEIGHT


# ----------------------------------- main -------------------------------------
if __name__ == "__main__":
    key = jax.random.PRNGKey(0)
    k1, k2, k3 = jax.random.split(key, 3)
    B, CH, H, W = 2, 4, 16, 16
    GT = jax.random.uniform(k1, (B, CH, H, W), jnp.float32)
    blur = jnp.clip(GT + 0.1 * jax.random.normal(k2, (B, CH, H, W), jnp.float32), 0.0, 1.0)
    out = jnp.clip(GT + 0.05 * jax.random.normal(k3, (B, CH, H, W), jnp.float32), 0.0, 1.0)

    loss = jax.jit(fcl_loss)(blur, GT, out)
    loss = jax.block_until_ready(loss)

    ref = ref_loss(blur, GT, out)
    assert bool(jnp.isfinite(loss)), "kernel produced non-finite loss"
    rel = abs(float(loss) - float(ref)) / max(1.0, abs(float(ref)))
    assert rel <= 5e-3, f"mismatch: kernel={float(loss)} ref={float(ref)}"

    print("KERNEL_OK")
</pallas_src>

<mosaic_0001>
module attributes {stable_mosaic.version = 11 : i64} {
  func.func @fcl_kernel(%arg0: i32, %arg1: memref<1x16x128xf32, #tpu.memory_space<vmem>>, %arg2: memref<1x16x128xf32, #tpu.memory_space<vmem>>, %arg3: memref<1x16x128xf32, #tpu.memory_space<vmem>>, %arg4: memref<128x128xbf16, #tpu.memory_space<vmem>>, %arg5: memref<16x16xbf16, #tpu.memory_space<vmem>>, %arg6: memref<1x4xf32, #tpu.memory_space<smem>>) attributes {dimension_semantics = [#tpu.dimension_semantics<parallel>], iteration_bounds = array<i64: 1>, scalar_prefetch = 0 : i64, scratch_operands = 0 : i64, tpu.core_type = #tpu.core_type<tc>, window_params = [{transform_indices = @transform_0, window_bounds = array<i64: 1, 16, 128>}, {transform_indices = @transform_1, window_bounds = array<i64: 1, 16, 128>}, {transform_indices = @transform_2, window_bounds = array<i64: 1, 16, 128>}, {pipeline_mode = #tpu.pipeline_mode<synchronous>, transform_indices = @transform_3, window_bounds = array<i64: 128, 128>}, {pipeline_mode = #tpu.pipeline_mode<synchronous>, transform_indices = @transform_4, window_bounds = array<i64: 16, 16>}, {transform_indices = @transform_5, window_bounds = array<i64: 1, 4>}]} {
    %c0 = arith.constant 0 : index
    %c0_0 = arith.constant 0 : index
    %c0_1 = arith.constant 0 : index
    %0 = vector.load %arg1[%c0, %c0_0, %c0_1] : memref<1x16x128xf32, #tpu.memory_space<vmem>>, vector<1x16x128xf32>
    %c0_2 = arith.constant 0 : index
    %c0_3 = arith.constant 0 : index
    %c0_4 = arith.constant 0 : index
    %1 = vector.load %arg2[%c0_2, %c0_3, %c0_4] : memref<1x16x128xf32, #tpu.memory_space<vmem>>, vector<1x16x128xf32>
    %c0_5 = arith.constant 0 : index
    %c0_6 = arith.constant 0 : index
    %c0_7 = arith.constant 0 : index
    %2 = vector.load %arg3[%c0_5, %c0_6, %c0_7] : memref<1x16x128xf32, #tpu.memory_space<vmem>>, vector<1x16x128xf32>
    %3 = vector.shape_cast %0 : vector<1x16x128xf32> to vector<16x128xf32>
    %4 = arith.truncf %3 : vector<16x128xf32> to vector<16x128xbf16>
    %c0_8 = arith.constant 0 : index
    %c0_9 = arith.constant 0 : index
    %5 = vector.load %arg4[%c0_8, %c0_9] : memref<128x128xbf16, #tpu.memory_space<vmem>>, vector<128x128xbf16>
    %cst = arith.constant dense<0.000000e+00> : vector<16x128xf32>
    %6 = tpu.matmul %4, %5, %cst {dimension_numbers = #tpu.dot_dimension_numbers<[1], [0], [0], [1], [0, 0, 1, 1], [], []>} : vector<16x128xbf16>, vector<128x128xbf16>, vector<16x128xf32> -> vector<16x128xf32>
    %7 = vector.shape_cast %6 : vector<16x128xf32> to vector<1x16x128xf32>
    %8 = arith.truncf %7 : vector<1x16x128xf32> to vector<1x16x128xbf16>
    %c0_10 = arith.constant 0 : index
    %c0_11 = arith.constant 0 : index
    %9 = vector.load %arg5[%c0_10, %c0_11] : memref<16x16xbf16, #tpu.memory_space<vmem>>, vector<16x16xbf16>
    %10 = vector.shape_cast %9 : vector<16x16xbf16> to vector<1x16x16xbf16>
    "tpu.trace_start"() <{level = 10 : i32, message = "rhk,rkc->rhc"}> : () -> ()
    %cst_12 = arith.constant dense<0.000000e+00> : vector<1x16x128xf32>
    %11 = tpu.matmul %10, %8, %cst_12 {dimension_numbers = #tpu.dot_dimension_numbers<[2], [1], [1], [2], [0, 0, 0, 1, 1, 2], [0], [0]>} : vector<1x16x16xbf16>, vector<1x16x128xbf16>, vector<1x16x128xf32> -> vector<1x16x128xf32>
    "tpu.trace_stop"() : () -> ()
    %12 = tpu.iota {dimensions = array<i32: 0>} : vector<16x128xi32>
    %13 = tpu.iota {dimensions = array<i32: 1>} : vector<16x128xi32>
    %c2_i32 = arith.constant 2 : i32
    %c0_i32 = arith.constant 0 : i32
    %14 = arith.cmpi eq, %c2_i32, %c0_i32 : i32
    %c1_i32 = arith.constant 1 : i32
    %15 = arith.select %14, %c1_i32, %c2_i32 : i32
    %16 = vector.broadcast %15 : i32 to vector<16x128xi32>
    %17 = arith.remsi %12, %16 : vector<16x128xi32>
    %c0_i32_13 = arith.constant 0 : i32
    %18 = vector.broadcast %c0_i32_13 : i32 to vector<16x128xi32>
    %19 = arith.cmpi ne, %17, %18 : vector<16x128xi32>
    %c0_i32_14 = arith.constant 0 : i32
    %20 = vector.broadcast %c0_i32_14 : i32 to vector<16x128xi32>
    %21 = arith.cmpi slt, %17, %20 : vector<16x128xi32>
    %c0_i32_15 = arith.constant 0 : i32
    %22 = arith.cmpi slt, %15, %c0_i32_15 : i32
    %23 = vector.broadcast %22 : i1 to vector<16x128xi1>
    %24 = vector.broadcast %23 : vector<16x128xi1> to vector<16x128xi1>
    %25 = arith.xori %21, %24 : vector<16x128xi1>
    %26 = arith.andi %25, %19 : vector<16x128xi1>
    %27 = vector.broadcast %15 : i32 to vector<16x128xi32>
    %28 = arith.addi %17, %27 : vector<16x128xi32>
    %29 = arith.select %26, %28, %17 : vector<16x128xi1>, vector<16x128xi32>
    %c0_i32_16 = arith.constant 0 : i32
    %30 = vector.broadcast %c0_i32_16 : i32 to vector<16x128xi32>
    %31 = arith.cmpi eq, %29, %30 : vector<16x128xi32>
    %c2_i32_17 = arith.constant 2 : i32
    %c0_i32_18 = arith.constant 0 : i32
    %32 = arith.cmpi eq, %c2_i32_17, %c0_i32_18 : i32
    %c1_i32_19 = arith.constant 1 : i32
    %33 = arith.select %32, %c1_i32_19, %c2_i32_17 : i32
    %34 = vector.broadcast %33 : i32 to vector<16x128xi32>
    %35 = arith.remsi %13, %34 : vector<16x128xi32>
    %c0_i32_20 = arith.constant 0 : i32
    %36 = vector.broadcast %c0_i32_20 : i32 to vector<16x128xi32>
    %37 = arith.cmpi ne, %35, %36 : vector<16x128xi32>
    %c0_i32_21 = arith.constant 0 : i32
    %38 = vector.broadcast %c0_i32_21 : i32 to vector<16x128xi32>
    %39 = arith.cmpi slt, %35, %38 : vector<16x128xi32>
    %c0_i32_22 = arith.constant 0 : i32
    %40 = arith.cmpi slt, %33, %c0_i32_22 : i32
    %41 = vector.broadcast %40 : i1 to vector<16x128xi1>
    %42 = vector.broadcast %41 : vector<16x128xi1> to vector<16x128xi1>
    %43 = arith.xori %39, %42 : vector<16x128xi1>
    %44 = arith.andi %43, %37 : vector<16x128xi1>
    %45 = vector.broadcast %33 : i32 to vector<16x128xi32>
    %46 = arith.addi %35, %45 : vector<16x128xi32>
    %47 = arith.select %44, %46, %35 : vector<16x128xi1>, vector<16x128xi32>
    %c0_i32_23 = arith.constant 0 : i32
    %48 = vector.broadcast %c0_i32_23 : i32 to vector<16x128xi32>
    %49 = arith.cmpi eq, %47, %48 : vector<16x128xi32>
    %50 = arith.andi %31, %49 : vector<16x128xi1>
    %51 = arith.extui %50 : vector<16x128xi1> to vector<16x128xi32>
    %52 = arith.sitofp %51 : vector<16x128xi32> to vector<16x128xf32>
    %53 = arith.subf %2, %1 : vector<1x16x128xf32>
    %c127_i32 = arith.constant 127 : i32
    %54 = tpu.dynamic_rotate %53 by %c127_i32 dim 2 : vector<1x16x128xf32>, i32 -> vector<1x16x128xf32>
    %55 = arith.addf %53, %54 : vector<1x16x128xf32>
    %56 = arith.subf %53, %54 : vector<1x16x128xf32>
    %c15_i32 = arith.constant 15 : i32
    %57 = tpu.dynamic_rotate %55 by %c15_i32 dim 1 : vector<1x16x128xf32>, i32 -> vector<1x16x128xf32>
    %c15_i32_24 = arith.constant 15 : i32
    %58 = tpu.dynamic_rotate %56 by %c15_i32_24 dim 1 : vector<1x16x128xf32>, i32 -> vector<1x16x128xf32>
    %59 = arith.subf %55, %57 : vector<1x16x128xf32>
    %60 = math.absf %59 : vector<1x16x128xf32>
    %61 = arith.addf %56, %58 : vector<1x16x128xf32>
    %62 = math.absf %61 : vector<1x16x128xf32>
    %63 = arith.addf %60, %62 : vector<1x16x128xf32>
    %64 = arith.subf %56, %58 : vector<1x16x128xf32>
    %65 = math.absf %64 : vector<1x16x128xf32>
    %66 = arith.addf %63, %65 : vector<1x16x128xf32>
    %67 = vector.shape_cast %52 : vector<16x128xf32> to vector<1x16x128xf32>
    %68 = arith.mulf %66, %67 : vector<1x16x128xf32>
    %69 = vector.shape_cast %68 : vector<1x16x128xf32> to vector<1x1x16x128xf32>
    %cst_25 = arith.constant dense<0.000000e+00> : vector<1xf32>
    %70 = vector.multi_reduction <add>, %69, %cst_25 [1, 2, 3] : vector<1x1x16x128xf32> to vector<1xf32>
    %71 = vector.shape_cast %70 : vector<1xf32> to vector<1x1x1x1xf32>
    %72 = vector.extract %71[0, 0, 0, 0] : f32 from vector<1x1x1x1xf32>
    %cst_26 = arith.constant 5.000000e-01 : f32
    %73 = arith.mulf %cst_26, %72 : f32
    %74 = arith.addf %55, %57 : vector<1x16x128xf32>
    %75 = math.absf %74 : vector<1x16x128xf32>
    %76 = vector.shape_cast %52 : vector<16x128xf32> to vector<1x16x128xf32>
    %77 = arith.mulf %75, %76 : vector<1x16x128xf32>
    %78 = vector.shape_cast %77 : vector<1x16x128xf32> to vector<1x1x16x128xf32>
    %cst_27 = arith.constant dense<0.000000e+00> : vector<1xf32>
    %79 = vector.multi_reduction <add>, %78, %cst_27 [1, 2, 3] : vector<1x1x16x128xf32> to vector<1xf32>
    %80 = vector.shape_cast %79 : vector<1xf32> to vector<1x1x1x1xf32>
    %81 = vector.extract %80[0, 0, 0, 0] : f32 from vector<1x1x1x1xf32>
    %cst_28 = arith.constant 5.000000e-01 : f32
    %82 = arith.mulf %cst_28, %81 : f32
    %83 = arith.subf %2, %0 : vector<1x16x128xf32>
    %c127_i32_29 = arith.constant 127 : i32
    %84 = tpu.dynamic_rotate %83 by %c127_i32_29 dim 2 : vector<1x16x128xf32>, i32 -> vector<1x16x128xf32>
    %85 = arith.addf %83, %84 : vector<1x16x128xf32>
    %86 = arith.subf %83, %84 : vector<1x16x128xf32>
    %c15_i32_30 = arith.constant 15 : i32
    %87 = tpu.dynamic_rotate %85 by %c15_i32_30 dim 1 : vector<1x16x128xf32>, i32 -> vector<1x16x128xf32>
    %c15_i32_31 = arith.constant 15 : i32
    %88 = tpu.dynamic_rotate %86 by %c15_i32_31 dim 1 : vector<1x16x128xf32>, i32 -> vector<1x16x128xf32>
    %89 = arith.subf %85, %87 : vector<1x16x128xf32>
    %90 = math.absf %89 : vector<1x16x128xf32>
    %91 = arith.addf %86, %88 : vector<1x16x128xf32>
    %92 = math.absf %91 : vector<1x16x128xf32>
    %93 = arith.addf %90, %92 : vector<1x16x128xf32>
    %94 = arith.subf %86, %88 : vector<1x16x128xf32>
    %95 = math.absf %94 : vector<1x16x128xf32>
    %96 = arith.addf %93, %95 : vector<1x16x128xf32>
    %97 = vector.shape_cast %52 : vector<16x128xf32> to vector<1x16x128xf32>
    %98 = arith.mulf %96, %97 : vector<1x16x128xf32>
    %99 = vector.shape_cast %98 : vector<1x16x128xf32> to vector<1x1x16x128xf32>
    %cst_32 = arith.constant dense<0.000000e+00> : vector<1xf32>
    %100 = vector.multi_reduction <add>, %99, %cst_32 [1, 2, 3] : vector<1x1x16x128xf32> to vector<1xf32>
    %101 = vector.shape_cast %100 : vector<1xf32> to vector<1x1x1x1xf32>
    %102 = vector.extract %101[0, 0, 0, 0] : f32 from vector<1x1x1x1xf32>
    %cst_33 = arith.constant 5.000000e-01 : f32
    %103 = arith.mulf %cst_33, %102 : f32
    %104 = arith.subf %2, %11 : vector<1x16x128xf32>
    %c127_i32_34 = arith.constant 127 : i32
    %105 = tpu.dynamic_rotate %104 by %c127_i32_34 dim 2 : vector<1x16x128xf32>, i32 -> vector<1x16x128xf32>
    %106 = arith.addf %104, %105 : vector<1x16x128xf32>
    %107 = arith.subf %104, %105 : vector<1x16x128xf32>
    %c15_i32_35 = arith.constant 15 : i32
    %108 = tpu.dynamic_rotate %106 by %c15_i32_35 dim 1 : vector<1x16x128xf32>, i32 -> vector<1x16x128xf32>
    %c15_i32_36 = arith.constant 15 : i32
    %109 = tpu.dynamic_rotate %107 by %c15_i32_36 dim 1 : vector<1x16x128xf32>, i32 -> vector<1x16x128xf32>
    %110 = arith.subf %106, %108 : vector<1x16x128xf32>
    %111 = math.absf %110 : vector<1x16x128xf32>
    %112 = arith.addf %107, %109 : vector<1x16x128xf32>
    %113 = math.absf %112 : vector<1x16x128xf32>
    %114 = arith.addf %111, %113 : vector<1x16x128xf32>
    %115 = arith.subf %107, %109 : vector<1x16x128xf32>
    %116 = math.absf %115 : vector<1x16x128xf32>
    %117 = arith.addf %114, %116 : vector<1x16x128xf32>
    %118 = vector.shape_cast %52 : vector<16x128xf32> to vector<1x16x128xf32>
    %119 = arith.mulf %117, %118 : vector<1x16x128xf32>
    %120 = vector.shape_cast %119 : vector<1x16x128xf32> to vector<1x1x16x128xf32>
    %cst_37 = arith.constant dense<0.000000e+00> : vector<1xf32>
    %121 = vector.multi_reduction <add>, %120, %cst_37 [1, 2, 3] : vector<1x1x16x128xf32> to vector<1xf32>
    %122 = vector.shape_cast %121 : vector<1xf32> to vector<1x1x1x1xf32>
    %123 = vector.extract %122[0, 0, 0, 0] : f32 from vector<1x1x1x1xf32>
    %cst_38 = arith.constant 5.000000e-01 : f32
    %124 = arith.mulf %cst_38, %123 : f32
    %c0_39 = arith.constant 0 : index
    %c0_40 = arith.constant 0 : index
    %125 = memref.load %arg6[%c0_39, %c0_40] : memref<1x4xf32, #tpu.memory_space<smem>>
    memref.store %82, %arg6[%c0_39, %c0_40] : memref<1x4xf32, #tpu.memory_space<smem>>
    %c0_41 = arith.constant 0 : index
    %c1 = arith.constant 1 : index
    %126 = memref.load %arg6[%c0_41, %c1] : memref<1x4xf32, #tpu.memory_space<smem>>
    memref.store %73, %arg6[%c0_41, %c1] : memref<1x4xf32, #tpu.memory_space<smem>>
    %c0_42 = arith.constant 0 : index
    %c2 = arith.constant 2 : index
    %127 = memref.load %arg6[%c0_42, %c2] : memref<1x4xf32, #tpu.memory_space<smem>>
    memref.store %103, %arg6[%c0_42, %c2] : memref<1x4xf32, #tpu.memory_space<smem>>
    %c0_43 = arith.constant 0 : index
    %c3 = arith.constant 3 : index
    %128 = memref.load %arg6[%c0_43, %c3] : memref<1x4xf32, #tpu.memory_space<smem>>
    memref.store %124, %arg6[%c0_43, %c3] : memref<1x4xf32, #tpu.memory_space<smem>>
    return
  }
  func.func @transform_0(%arg0: i32) -> (i32, i32, i32) {
    %c0_i32 = arith.constant 0 : i32
    %c0_i32_0 = arith.constant 0 : i32
    %c0_i32_1 = arith.constant 0 : i32
    return %arg0, %c0_i32, %c0_i32_0 : i32, i32, i32
  }
  func.func @transform_1(%arg0: i32) -> (i32, i32, i32) {
    %c0_i32 = arith.constant 0 : i32
    %c0_i32_0 = arith.constant 0 : i32
    %c0_i32_1 = arith.constant 0 : i32
    return %arg0, %c0_i32, %c0_i32_0 : i32, i32, i32
  }
  func.func @transform_2(%arg0: i32) -> (i32, i32, i32) {
    %c0_i32 = arith.constant 0 : i32
    %c0_i32_0 = arith.constant 0 : i32
    %c0_i32_1 = arith.constant 0 : i32
    return %arg0, %c0_i32, %c0_i32_0 : i32, i32, i32
  }
  func.func @transform_3(%arg0: i32) -> (i32, i32) {
    %c0_i32 = arith.constant 0 : i32
    %c0_i32_0 = arith.constant 0 : i32
    %c0_i32_1 = arith.constant 0 : i32
    return %c0_i32, %c0_i32_0 : i32, i32
  }
  func.func @transform_4(%arg0: i32) -> (i32, i32) {
    %c0_i32 = arith.constant 0 : i32
    %c0_i32_0 = arith.constant 0 : i32
    %c0_i32_1 = arith.constant 0 : i32
    return %c0_i32, %c0_i32_0 : i32, i32
  }
  func.func @transform_5(%arg0: i32) -> (i32, i32) {
    %c0_i32 = arith.constant 0 : i32
    %c0_i32_0 = arith.constant 0 : i32
    return %arg0, %c0_i32 : i32, i32
  }
}

</mosaic_0001>

<llo_original>
// kernel: fcl_loss.1
$region0: #{fcl_loss.1}
  #allocation0 [shape = 'u32[]', space=smem, size = 0x4, offset = 0x4, fixed_abs, tag = 'smem constant byte address 0x4 - core index']
  #allocation1 [shape = 'u32[144,128]{1,0:T(1,128)}', space=vmem, size = 0x12000, scoped, tag = 'internal scratch']
  %s0 = inlined_call_operand.vmem [shape: f32[1,16,128], index: 0, kind: input, shape index: {}]
  %s1 = inlined_call_operand.vmem [shape: f32[1,16,128], index: 1, kind: input, shape index: {}]
  %s2 = inlined_call_operand.vmem [shape: f32[1,16,128], index: 2, kind: input, shape index: {}]
  %s3 = inlined_call_operand.vmem [shape: bf16[128,128], index: 3, kind: input, shape index: {}]
  %s4 = inlined_call_operand.vmem [shape: bf16[16,16], index: 4, kind: input, shape index: {}]
  %s5 = inlined_call_operand.vmem [shape: f32[1,4], index: 5, kind: output, shape index: {}]
  %s6 = sld [smem:[#allocation0]]
  $region30: #{fcl_loss.1} parent=0
    _
  %s8 = ssub.s32 1, %s6
  %s9 = scalar_select 0, %s8, %s6
  $region1: #{fcl_loss.1} parent=0
    #allocation2 [shape = 'u8[512]{0}', space=smem, size = 0x200, scoped, tag = 'output window, operand 0, single buffered']
    #allocation3 [shape = 's32[1]{0}', space=sflag, size = 0x4, scoped, tag = 'scoped memory for fcl_loss.1']
    %10 = vsyncpa [#allocation3], 0
    // Predicated region
    $region2: #{fcl_loss.1} parent=1 // pred_check
      _
    $region3: #{fcl_loss.1} parent=1 // pred_check_branch
      %12 = sbr.rel (0) target = $region5
    $region4: #{fcl_loss.1} parent=1 // pred_region
      _
    $region5: #{fcl_loss.1} parent=1 // pred_fallthru
      _
    // Predicated region
    $region6: #{fcl_loss.1} parent=1 // pred_check
      _
    $region7: #{fcl_loss.1} parent=1 // pred_check_branch
      %14 = sbr.rel (0) target = $region9
    $region8: #{fcl_loss.1} parent=1 // pred_region
      _
    $region9: #{fcl_loss.1} parent=1 // pred_fallthru
      _
    // Predicated region
    $region10: #{fcl_loss.1} parent=1 // pred_check
      _
    $region11: #{fcl_loss.1} parent=1 // pred_check_branch
      %16 = sbr.rel (0) target = $region13
    $region12: #{fcl_loss.1} parent=1 // pred_region
      _
    $region13: #{fcl_loss.1} parent=1 // pred_fallthru
      _
    // Predicated region
    $region14: #{fcl_loss.1} parent=1 // pred_check
      _
    $region15: #{fcl_loss.1} parent=1 // pred_check_branch
      %18 = sbr.rel (0) target = $region17
    $region16: #{fcl_loss.1} parent=1 // pred_region
      _
    $region17: #{fcl_loss.1} parent=1 // pred_fallthru
      _
    // Predicated region
    $region18: #{fcl_loss.1} parent=1 // pred_check
      _
    $region19: #{fcl_loss.1} parent=1 // pred_check_branch
      %20 = sbr.rel (0) target = $region21
    $region20: #{fcl_loss.1} parent=1 // pred_region
      _
    $region21: #{fcl_loss.1} parent=1 // pred_fallthru
      _
    %v22 = vld [vmem:[%s0] sm:$0xff]
    %v23 = vld [vmem:[%s0 + $0x8] sm:$0xff]
    %v24 = vld [vmem:[%s1] sm:$0xff]
    %v25 = vld [vmem:[%s1 + $0x8] sm:$0xff]
    %v26 = vld [vmem:[%s2] sm:$0xff]
    %v27 = vld [vmem:[%s2 + $0x8] sm:$0xff]
    %v28 = vpack.c.bf16 %v23, %v22
    %v29 = vld [vmem:[%s3] sm:$0xf]
    %v30 = vld [vmem:[%s3 + $0x4] sm:$0xf]
    %v31 = vld [vmem:[%s3 + $0x8] sm:$0xf]
    %v32 = vld [vmem:[%s3 + $0xc] sm:$0xf]
    %v33 = vld [vmem:[%s3 + $0x10] sm:$0xf]
    %v34 = vld [vmem:[%s3 + $0x14] sm:$0xf]
    %v35 = vld [vmem:[%s3 + $0x18] sm:$0xf]
    %v36 = vld [vmem:[%s3 + $0x1c] sm:$0xf]
    %v37 = vld [vmem:[%s3 + $0x20] sm:$0xf]
    %v38 = vld [vmem:[%s3 + $0x24] sm:$0xf]
    %v39 = vld [vmem:[%s3 + $0x28] sm:$0xf]
    %v40 = vld [vmem:[%s3 + $0x2c] sm:$0xf]
    %v41 = vld [vmem:[%s3 + $0x30] sm:$0xf]
    %v42 = vld [vmem:[%s3 + $0x34] sm:$0xf]
    %v43 = vld [vmem:[%s3 + $0x38] sm:$0xf]
    %v44 = vld [vmem:[%s3 + $0x3c] sm:$0xf]
    %v61 = vunpack.c.l.b16 %v29
    %v62 = vunpack.c.l.b16 %v30
    %v63 = vunpack.c.l.b16 %v31
    %v64 = vunpack.c.l.b16 %v32
    %v65 = vunpack.c.l.b16 %v33
    %v66 = vunpack.c.l.b16 %v34
    %v67 = vunpack.c.l.b16 %v35
    %v68 = vunpack.c.l.b16 %v36
    %v69 = vunpack.c.l.b16 %v37
    %v70 = vunpack.c.l.b16 %v38
    %v71 = vunpack.c.l.b16 %v39
    %v72 = vunpack.c.l.b16 %v40
    %v73 = vunpack.c.l.b16 %v41
    %v74 = vunpack.c.l.b16 %v42
    %v75 = vunpack.c.l.b16 %v43
    %v76 = vunpack.c.l.b16 %v44
    %v77 = vpack.c.b16 %v62, %v61
    %v78 = vpack.c.b16 %v64, %v63
    %v79 = vpack.c.b16 %v66, %v65
    %v80 = vpack.c.b16 %v68, %v67
    %v81 = vpack.c.b16 %v70, %v69
    %v82 = vpack.c.b16 %v72, %v71
    %v83 = vpack.c.b16 %v74, %v73
    %v84 = vpack.c.b16 %v76, %v75
    %93 = vmatprep.subr.bf16.mxu0 0
    %94 = vmatpush1.bf16.msra.mxu0 %v77
    %95 = vmatprep.subr.bf16.mxu0 0
    %96 = vmatpush1.bf16.msra.mxu0 %v78
    %97 = vmatprep.subr.bf16.mxu0 0
    %98 = vmatpush1.bf16.msra.mxu0 %v79
    %99 = vmatprep.subr.bf16.mxu0 0
    %100 = vmatpush1.bf16.msra.mxu0 %v80
    %101 = vmatprep.subr.bf16.mxu0 0
    %102 = vmatpush1.bf16.msra.mxu0 %v81
    %103 = vmatprep.subr.bf16.mxu0 0
    %104 = vmatpush1.bf16.msra.mxu0 %v82
    %105 = vmatprep.subr.bf16.mxu0 0
    %106 = vmatpush1.bf16.msra.mxu0 %v83
    %107 = vmatprep.subr.bf16.mxu0 0
    %108 = vmatpush1.bf16.msra.mxu0 %v84
    %109 = vmatprep.subr.bf16.mxu0 0
    %110 = vmatpush1.bf16.msra.mxu0 0
    %111 = vmatprep.subr.bf16.mxu0 0
    %112 = vmatpush1.bf16.msra.mxu0 0
    %113 = vmatprep.subr.bf16.mxu0 0
    %114 = vmatpush1.bf16.msra.mxu0 0
    %115 = vmatprep.subr.bf16.mxu0 0
    %116 = vmatpush1.bf16.msra.mxu0 0
    %117 = vmatprep.subr.bf16.mxu0 0
    %118 = vmatpush1.bf16.msra.mxu0 0
    %119 = vmatprep.subr.bf16.mxu0 0
    %120 = vmatpush1.bf16.msra.mxu0 0
    %121 = vmatprep.subr.bf16.mxu0 0
    %122 = vmatpush1.bf16.msra.mxu0 0
    %123 = vmatprep.subr.bf16.mxu0 0
    %124 = vmatpush1.bf16.msra.mxu0 0
    %125 = vmatprep.mubr.bf16.mxu0 0
    %126 = vmatmul.mubr.bf16.gmra.mrb[0].mxu0 %v28
    %v127 = vpop.f32.mrb[0].mxu0
    %v128 = vadd.f32 0.0, %v127
    %v129 = vpop.f32.mrb[0].mxu0
    %v130 = vpop.f32.mrb[0].mxu0
    %v131 = vadd.f32 0.0, %v130
    %v132 = vpop.f32.mrb[0].mxu0
    %133 = vdwg.mxu0
    %v134 = vpack.c.bf16 %v131, %v128
    %v135 = vld [vmem:[%s4] sm:$0xf]
    %v136 = vld [vmem:[%s4 + $0x4] sm:$0xf]
    %v139 = vunpack.c.l.b16 %v135
    %v140 = vunpack.c.l.b16 %v136
    %v141 = vpack.c.b16 %v140, %v139
    %vm142 = vcmask 130048
    %v144 = vsel %vm142, %v141, 0
    %146 = vmatprep.subr.bf16.mxu0 0
    %147 = vmatpush1.bf16.msra.mxu0 %v134
    %148 = vmatprep.subr.bf16.mxu0 0
    %149 = vmatpush1.bf16.msra.mxu0 0
    %150 = vmatprep.subr.bf16.mxu0 0
    %151 = vmatpush1.bf16.msra.mxu0 0
    %152 = vmatprep.subr.bf16.mxu0 0
    %153 = vmatpush1.bf16.msra.mxu0 0
    %154 = vmatprep.subr.bf16.mxu0 0
    %155 = vmatpush1.bf16.msra.mxu0 0
    %156 = vmatprep.subr.bf16.mxu0 0
    %157 = vmatpush1.bf16.msra.mxu0 0
    %158 = vmatprep.subr.bf16.mxu0 0
    %159 = vmatpush1.bf16.msra.mxu0 0
    %160 = vmatprep.subr.bf16.mxu0 0
    %161 = vmatpush1.bf16.msra.mxu0 0
    %162 = vmatprep.subr.bf16.mxu0 0
    %163 = vmatpush1.bf16.msra.mxu0 0
    %164 = vmatprep.subr.bf16.mxu0 0
    %165 = vmatpush1.bf16.msra.mxu0 0
    %166 = vmatprep.subr.bf16.mxu0 0
    %167 = vmatpush1.bf16.msra.mxu0 0
    %168 = vmatprep.subr.bf16.mxu0 0
    %169 = vmatpush1.bf16.msra.mxu0 0
    %170 = vmatprep.subr.bf16.mxu0 0
    %171 = vmatpush1.bf16.msra.mxu0 0
    %172 = vmatprep.subr.bf16.mxu0 0
    %173 = vmatpush1.bf16.msra.mxu0 0
    %174 = vmatprep.subr.bf16.mxu0 0
    %175 = vmatpush1.bf16.msra.mxu0 0
    %176 = vmatprep.subr.bf16.mxu0 0
    %177 = vmatpush1.bf16.msra.mxu0 0
    %178 = vmatprep.mubr.bf16.mxu0 0
    %179 = vmatmul.mubr.bf16.gmra.mrb[0].mxu0 %v144
    %v180 = vpop.f32.mrb[0].mxu0
    %v181 = vadd.f32 0.0, %v180
    %v182 = vpop.f32.mrb[0].mxu0
    %v183 = vpop.f32.mrb[0].mxu0
    %v184 = vadd.f32 0.0, %v183
    %v185 = vpop.f32.mrb[0].mxu0
    %186 = vdwg.mxu0
    %v187 = vlaneseq
    %v188 = vshrl.u32 %v187, 7
    %v189 = vadd.s32 %v188, 8
    %v190 = vlaneseq
    %v191 = vand.u32 %v190, 127
    %vm192 = vcmp.lt.s32.totalorder %v188, 0
    %v193 = vsub.s32 0, %v188
    %v194 = vsel %vm192, %v193, %v188
    %v195 = vshrl.u32 %v194, 1
    %v196 = vand.u32 %v194, 1
    %v197 = vsub.s32 0, %v196
    %v198 = vsel %vm192, %v197, %v196
    %vm199 = vcmp.lt.s32.totalorder %v189, 0
    %v200 = vsub.s32 0, %v189
    %v201 = vsel %vm199, %v200, %v189
    %v202 = vshrl.u32 %v201, 1
    %v203 = vand.u32 %v201, 1
    %v204 = vsub.s32 0, %v203
    %v205 = vsel %vm199, %v204, %v203
    %vm206 = vcmp.ne.s32.totalorder %v198, 0
    %vm207 = vcmp.ne.s32.totalorder %v205, 0
    %vm208 = vcmp.lt.s32.totalorder %v198, 0
    %vm209 = vcmp.lt.s32.totalorder %v205, 0
    %vm210 = vmand %vm208, %vm206
    %vm211 = vmand %vm209, %vm207
    %v212 = vadd.s32 %v198, 2
    %v213 = vadd.s32 %v205, 2
    %v214 = vsel %vm210, %v212, %v198
    %v215 = vsel %vm211, %v213, %v205
    %vm216 = vcmp.eq.s32.totalorder %v214, 0
    %vm217 = vcmp.eq.s32.totalorder %v215, 0
    %vm218 = vcmp.lt.s32.totalorder %v191, 0
    %v219 = vsub.s32 0, %v191
    %v220 = vsel %vm218, %v219, %v191
    %v221 = vshrl.u32 %v220, 1
    %v222 = vand.u32 %v220, 1
    %v223 = vsub.s32 0, %v222
    %v224 = vsel %vm218, %v223, %v222
    %vm225 = vcmp.ne.s32.totalorder %v224, 0
    %vm226 = vcmp.lt.s32.totalorder %v224, 0
    %vm227 = vmand %vm226, %vm225
    %v228 = vadd.s32 %v224, 2
    %v229 = vsel %vm227, %v228, %v224
    %vm230 = vcmp.eq.s32.totalorder %v229, 0
    %vm231 = vmand %vm216, %vm230
    %vm232 = vmand %vm217, %vm230
    %v233 = vsel %vm231, 1, 0
    %v234 = vsel %vm232, 1, 0
    %v235 = vcvt.s32.f32 %v233
    %v236 = vcvt.s32.f32 %v234
    %v237 = vsub.f32 %v26, %v24
    %v238 = vsub.f32 %v27, %v25
    %239 = vrot.lane.b32.xlu0 %v237, 127
    %v240 = vpop.permute.xlu0 %239
    %241 = vrot.lane.b32.xlu0 %v238, 127
    %v242 = vpop.permute.xlu0 %241
    %v243 = vadd.f32 %v237, %v240
    %v244 = vadd.f32 %v238, %v242
    %v245 = vsub.f32 %v237, %v240
    %v246 = vsub.f32 %v238, %v242
    %v247 = vrot.slane %v243, 1
    %v248 = vrot.slane %v244, 1
    %vm249 = vcmp.lt.s32.totalorder %v188, 7
    %v250 = vsel %vm249, %v247, %v248
    %v251 = vsel %vm249, %v248, %v247
    %v252 = vrot.slane %v245, 1
    %v253 = vrot.slane %v246, 1
    %v254 = vsel %vm249, %v252, %v253
    %v255 = vsel %vm249, %v253, %v252
    %v256 = vsub.f32 %v243, %v250
    %v257 = vsub.f32 %v244, %v251
    %v258 = vand.u32 2147483647, %v256
    %v259 = vand.u32 2147483647, %v257
    %v260 = vadd.f32 %v245, %v254
    %v261 = vadd.f32 %v246, %v255
    %v262 = vand.u32 2147483647, %v260
    %v263 = vand.u32 2147483647, %v261
    %v264 = vadd.f32 %v258, %v262
    %v265 = vadd.f32 %v259, %v263
    %v266 = vsub.f32 %v245, %v254
    %v267 = vsub.f32 %v246, %v255
    %v268 = vand.u32 2147483647, %v266
    %v269 = vand.u32 2147483647, %v267
    %v270 = vadd.f32 %v264, %v268
    %v271 = vadd.f32 %v265, %v269
    %v272 = vmul.f32 %v270, %v235
    %v273 = vmul.f32 %v271, %v236
    %v274 = vadd.f32 %v272, %v273
    %275 = vadd.xlane.f32.xlu0 %v274
    %v276 = vpop.xlane.xlu0 %275
    %v277 = vrot.slane %v276, 4
    %v278 = vadd.f32 %v276, %v277
    %v279 = vrot.slane %v278, 2
    %v280 = vadd.f32 %v278, %v279
    %v281 = vrot.slane %v280, 1
    %v282 = vadd.f32 %v280, %v281
    %s283 = vtos %v282
    %s284 = smul.f32 %s283, 0.5
    %v285 = vadd.f32 %v243, %v250
    %v286 = vadd.f32 %v244, %v251
    %v287 = vand.u32 2147483647, %v285
    %v288 = vand.u32 2147483647, %v286
    %v289 = vmul.f32 %v287, %v235
    %v290 = vmul.f32 %v288, %v236
    %v291 = vadd.f32 %v289, %v290
    %292 = vadd.xlane.f32.xlu0 %v291
    %v293 = vpop.xlane.xlu0 %292
    %v294 = vrot.slane %v293, 4
    %v295 = vadd.f32 %v293, %v294
    %v296 = vrot.slane %v295, 2
    %v297 = vadd.f32 %v295, %v296
    %v298 = vrot.slane %v297, 1
    %v299 = vadd.f32 %v297, %v298
    %s300 = vtos %v299
    %s301 = smul.f32 %s300, 0.5
    %v302 = vsub.f32 %v26, %v22
    %v303 = vsub.f32 %v27, %v23
    %304 = vrot.lane.b32.xlu0 %v302, 127
    %v305 = vpop.permute.xlu0 %304
    %306 = vrot.lane.b32.xlu0 %v303, 127
    %v307 = vpop.permute.xlu0 %306
    %v308 = vadd.f32 %v302, %v305
    %v309 = vadd.f32 %v303, %v307
    %v310 = vsub.f32 %v302, %v305
    %v311 = vsub.f32 %v303, %v307
    %v312 = vrot.slane %v308, 1
    %v313 = vrot.slane %v309, 1
    %v314 = vsel %vm249, %v312, %v313
    %v315 = vsel %vm249, %v313, %v312
    %v316 = vrot.slane %v310, 1
    %v317 = vrot.slane %v311, 1
    %v318 = vsel %vm249, %v316, %v317
    %v319 = vsel %vm249, %v317, %v316
    %v320 = vsub.f32 %v308, %v314
    %v321 = vsub.f32 %v309, %v315
    %v322 = vand.u32 2147483647, %v320
    %v323 = vand.u32 2147483647, %v321
    %v324 = vadd.f32 %v310, %v318
    %v325 = vadd.f32 %v311, %v319
    %v326 = vand.u32 2147483647, %v324
    %v327 = vand.u32 2147483647, %v325
    %v328 = vadd.f32 %v322, %v326
    %v329 = vadd.f32 %v323, %v327
    %v330 = vsub.f32 %v310, %v318
    %v331 = vsub.f32 %v311, %v319
    %v332 = vand.u32 2147483647, %v330
    %v333 = vand.u32 2147483647, %v331
    %v334 = vadd.f32 %v328, %v332
    %v335 = vadd.f32 %v329, %v333
    %v336 = vmul.f32 %v334, %v235
    %v337 = vmul.f32 %v335, %v236
    %v338 = vadd.f32 %v336, %v337
    %339 = vadd.xlane.f32.xlu0 %v338
    %v340 = vpop.xlane.xlu0 %339
    %v341 = vrot.slane %v340, 4
    %v342 = vadd.f32 %v340, %v341
    %v343 = vrot.slane %v342, 2
    %v344 = vadd.f32 %v342, %v343
    %v345 = vrot.slane %v344, 1
    %v346 = vadd.f32 %v344, %v345
    %s347 = vtos %v346
    %s348 = smul.f32 %s347, 0.5
    %v349 = vsub.f32 %v26, %v181
    %v350 = vsub.f32 %v27, %v184
    %351 = vrot.lane.b32.xlu0 %v349, 127
    %v352 = vpop.permute.xlu0 %351
    %353 = vrot.lane.b32.xlu0 %v350, 127
    %v354 = vpop.permute.xlu0 %353
    %v355 = vadd.f32 %v349, %v352
    %v356 = vadd.f32 %v350, %v354
    %v357 = vsub.f32 %v349, %v352
    %v358 = vsub.f32 %v350, %v354
    %v359 = vrot.slane %v355, 1
    %v360 = vrot.slane %v356, 1
    %v361 = vsel %vm249, %v359, %v360
    %v362 = vsel %vm249, %v360, %v359
    %v363 = vrot.slane %v357, 1
    %v364 = vrot.slane %v358, 1
    %v365 = vsel %vm249, %v363, %v364
    %v366 = vsel %vm249, %v364, %v363
    %v367 = vsub.f32 %v355, %v361
    %v368 = vsub.f32 %v356, %v362
    %v369 = vand.u32 2147483647, %v367
    %v370 = vand.u32 2147483647, %v368
    %v371 = vadd.f32 %v357, %v365
    %v372 = vadd.f32 %v358, %v366
    %v373 = vand.u32 2147483647, %v371
    %v374 = vand.u32 2147483647, %v372
    %v375 = vadd.f32 %v369, %v373
    %v376 = vadd.f32 %v370, %v374
    %v377 = vsub.f32 %v357, %v365
    %v378 = vsub.f32 %v358, %v366
    %v379 = vand.u32 2147483647, %v377
    %v380 = vand.u32 2147483647, %v378
    %v381 = vadd.f32 %v375, %v379
    %v382 = vadd.f32 %v376, %v380
    %v383 = vmul.f32 %v381, %v235
    %v384 = vmul.f32 %v382, %v236
    %v385 = vadd.f32 %v383, %v384
    %386 = vadd.xlane.f32.xlu0 %v385
    %v387 = vpop.xlane.xlu0 %386
    %v388 = vrot.slane %v387, 4
    %v389 = vadd.f32 %v387, %v388
    %v390 = vrot.slane %v389, 2
    %v391 = vadd.f32 %v389, %v390
    %v392 = vrot.slane %v391, 1
    %v393 = vadd.f32 %v391, %v392
    %s394 = vtos %v393
    %s395 = smul.f32 %s394, 0.5
    %s396 = scalar_lea.smem [#allocation2], 0
    %397 = sst [smem:[%s396]] %s301
    %s398 = scalar_lea.smem [#allocation2], 1
    %399 = sst [smem:[%s398]] %s284
    %s400 = scalar_lea.smem [#allocation2], 2
    %401 = sst [smem:[%s400]] %s348
    %s402 = scalar_lea.smem [#allocation2], 3
    %403 = sst [smem:[%s402]] %s395
    // Predicated region
    $region22: #{fcl_loss.1} parent=1 // pred_check
      _
    $region23: #{fcl_loss.1} parent=1 // pred_check_branch
      %405 = sbr.rel (0) target = $region25
    $region24: #{fcl_loss.1} parent=1 // pred_region
      %s407 = ssub.s32 16, 16
      %408 = vsyncadd [#allocation3], %s407
      %s410 = sshll.u32 %s5, 4
      %s411 = int_to_ptr.vmem [resolvable:$true] %s410
      %413 = dma.smem_to_vmem [#allocation2], 16, %s411, [#allocation3]
    $region25: #{fcl_loss.1} parent=1 // pred_fallthru
      _
    // Predicated region
    $region26: #{fcl_loss.1} parent=1 // pred_check
      _
    $region27: #{fcl_loss.1} parent=1 // pred_check_branch
      %415 = sbr.rel (0) target = $region29
    $region28: #{fcl_loss.1} parent=1 // pred_region
      %416 = dma.done [#allocation3], 16
    $region29: #{fcl_loss.1} parent=1 // pred_fallthru
      _
    %417 = sfence
    %418 = vsyncpa [#allocation3], 1

</llo_original>
